<compile_context>
chip_gen: v5e
topology: v5e:2x2
jax: 0.10.0
libtpu: 0.0.40
codegen_flags: <defaults>
</compile_context>

<pallas_src>
import functools

import jax
import jax.numpy as jnp
from jax import lax
from jax.experimental import pallas as pl
from jax.experimental.pallas import tpu as pltpu


def _vq_kernel(x_ref, emb_ref, quant_ref, counts_ref, sse_ref):
    # x_ref:      (1, D, TL)  lane-dense slice of x (L in lanes)
    # emb_ref:    (1, M, D)   codebook for this latent dim (resident across l)
    # quant_ref:  (1, D, TL)  quantized output (transposed, lane-dense)
    # counts_ref: (1, M, 1)   per-code assignment counts, accumulated over l
    # sse_ref:    (1, 1, 1)   sum of squared errors, accumulated over l
    l = pl.program_id(1)

    @pl.when(l == 0)
    def _():
        counts_ref[...] = jnp.zeros_like(counts_ref)
        sse_ref[...] = jnp.zeros_like(sse_ref)

    x = x_ref[0]      # (D, TL)
    e = emb_ref[0]    # (M, D)
    M = e.shape[0]
    TL = x.shape[1]

    # scores = ||e||^2 - 2 e.x  -> (M, TL).  ||x||^2 is a per-column constant and
    # does not affect the argmin; the -2 is folded into the tiny codebook operand.
    e2 = jnp.sum(e * e, axis=1, keepdims=True)                       # (M, 1)
    scores = e2 + jnp.dot(e * (-2.0), x,
                          preferred_element_type=jnp.float32)        # (M, TL)

    # First-index argmin over the codebook axis (matches torch.argmin tie-break).
    min_s = jnp.min(scores, axis=0, keepdims=True)                   # (1, TL)
    iota_m = lax.broadcasted_iota(jnp.int32, scores.shape, 0)        # (M, TL)
    idx = jnp.min(jnp.where(scores == min_s, iota_m, jnp.int32(M)),
                  axis=0, keepdims=True)                             # (1, TL)
    enc_t = (iota_m == idx).astype(jnp.float32)                      # (M, TL)

    # Gather the codewords on the MXU: quant^T = e^T @ enc^T -> (D, TL), lane-dense.
    quant_ref[0] = lax.dot_general(
        e, enc_t, (((0,), (0,)), ((), ())),
        preferred_element_type=jnp.float32)

    # Per-code counts on the (otherwise idle) MXU: enc^T @ 1 -> (M, 1); accumulate.
    ones_col = jnp.ones((TL, 1), jnp.float32)
    counts_ref[0] += jnp.dot(enc_t, ones_col,
                             preferred_element_type=jnp.float32)

    # ||x - q||^2 per column == ||x||^2 + min_m(scores); clamp at 0 (cancellation).
    x2 = jnp.sum(x * x, axis=0, keepdims=True)                       # (1, TL)
    sse_ref[0] += jnp.sum(jnp.maximum(x2 + min_s, 0.0),
                          axis=1, keepdims=True)                     # (1, 1)


def _pick_tile_l(L, max_tile):
    """Largest multiple of 128 that divides L and is <= max_tile; else full L."""
    best = None
    t = 128
    while t <= min(L, max_tile):
        if L % t == 0:
            best = t
        t += 128
    return best if best is not None else L


def vq_embedding_forward(x, embedding, commitment_cost=0.25, tile_l_max=2048):
    """Eval-mode forward of VQEmbeddingEMA.

    x:         (B, C, H, W) float32, C == N * D
    embedding: (N, M, D)    float32 codebook
    returns (quantized (B,C,H,W), loss scalar, perplexity-sum scalar)

    tile_l_max caps the L tile.  With the lane-dense layout the per-step VMEM is
    ~4*D*TL*4 B for x/quant (double-buffered) plus ~4*M*TL*4 B of intermediates;
    the default TL<=2048 stays comfortably inside the v5e 16 MiB scoped default,
    v6e 32 MiB and v7x 64 MiB-physical budgets.
    """
    B, C, H, W = x.shape
    N, M, D = embedding.shape
    assert C == N * D
    L = B * H * W

    # Glue: NCHW -> (N, D, L) lane-dense layout (same L ordering as the torch
    # view/permute/reshape chain: L flattens (B, H, W)).
    x_t = x.reshape(B, N, D, H, W).transpose(1, 2, 0, 3, 4).reshape(N, D, L)

    TL = _pick_tile_l(L, tile_l_max)
    grid_l = L // TL

    out_shapes = (
        jax.ShapeDtypeStruct((N, D, L), jnp.float32),   # quantized (transposed)
        jax.ShapeDtypeStruct((N, M, 1), jnp.float32),   # per-code counts
        jax.ShapeDtypeStruct((N, 1, 1), jnp.float32),   # sum of squared errors
    )

    quant_t, counts, sse = pl.pallas_call(
        _vq_kernel,
        out_shape=out_shapes,
        grid_spec=pltpu.PrefetchScalarGridSpec(
            num_scalar_prefetch=0,
            grid=(N, grid_l),
            in_specs=[
                pl.BlockSpec((1, D, TL), lambda n, l: (n, 0, l)),
                pl.BlockSpec((1, M, D), lambda n, l: (n, 0, 0)),  # resident over l
            ],
            out_specs=[
                pl.BlockSpec((1, D, TL), lambda n, l: (n, 0, l)),
                pl.BlockSpec((1, M, 1), lambda n, l: (n, 0, 0)),  # accumulator
                pl.BlockSpec((1, 1, 1), lambda n, l: (n, 0, 0)),  # accumulator
            ],
        ),
        compiler_params=pltpu.CompilerParams(
            dimension_semantics=("parallel", "arbitrary")),
    )(x_t, embedding)

    # F.mse_loss(x, quantized.detach()) == mean over all N*L*D elements.
    e_latent_loss = jnp.sum(sse) / (N * L * D)
    loss = commitment_cost * e_latent_loss

    # Straight-through: forward value of x + (q - x).detach() is just q.
    # (N, D, L) -> (N, D, B, H, W) -> (B, N, D, H, W) -> (B, C, H, W)
    out = quant_t.reshape(N, D, B, H, W).transpose(2, 0, 1, 3, 4).reshape(B, C, H, W)

    avg_probs = counts[:, :, 0] / L                                   # (N, M)
    perplexity = jnp.exp(-jnp.sum(avg_probs * jnp.log(avg_probs + 1e-10), axis=-1))
    return out, loss, jnp.sum(perplexity)


def vq_embedding_forward_ref(x, embedding, commitment_cost=0.25):
    """Pure-JAX reference mirroring the PyTorch module (eval mode).

    The argmin is taken over ||e||^2 - 2 x.e, which selects the same code as the
    full distance (||x||^2 is constant per point) but avoids adding a large
    per-point constant whose rounding could flip near-ties differently between
    the reference and the kernel.  Loss / perplexity are computed directly.
    """
    B, C, H, W = x.shape
    N, M, D = embedding.shape
    xv = x.reshape(B, N, D, H, W).transpose(1, 0, 3, 4, 2)            # (N,B,H,W,D)
    x_flat = xv.reshape(N, -1, D)
    e2 = jnp.sum(embedding ** 2, axis=2)[:, None, :]                  # (N,1,M)
    xe = jnp.einsum("nld,nmd->nlm", x_flat, embedding,
                    precision="highest")
    scores = e2 - 2.0 * xe                                            # (N,L,M)
    idx = jnp.argmin(scores, axis=-1)                                 # (N,L)
    enc = jax.nn.one_hot(idx, M, dtype=jnp.float32)                   # (N,L,M)
    quant = jnp.take_along_axis(embedding, idx[..., None], axis=1)    # (N,L,D)
    quant = quant.reshape(xv.shape)
    e_latent_loss = jnp.mean((xv - quant) ** 2)
    loss = commitment_cost * e_latent_loss
    avg_probs = jnp.mean(enc, axis=1)
    perplexity = jnp.exp(-jnp.sum(avg_probs * jnp.log(avg_probs + 1e-10), axis=-1))
    out = quant.transpose(1, 0, 4, 2, 3).reshape(B, C, H, W)
    return out, loss, jnp.sum(perplexity)


if __name__ == "__main__":
    # Module hyperparameters (small, consistent with the forward's C == N*D).
    latent_dim = 2        # N
    num_embeddings = 128  # M
    embedding_dim = 8     # D
    B, H, W = 2, 16, 16
    C = latent_dim * embedding_dim

    key = jax.random.PRNGKey(0)
    kx, ke = jax.random.split(key)

    x = jax.random.normal(kx, (B, C, H, W), dtype=jnp.float32)
    # embedding.uniform_(-1/M, 1/M), deterministic init
    embedding = jax.random.uniform(
        ke, (latent_dim, num_embeddings, embedding_dim),
        dtype=jnp.float32,
        minval=-1.0 / num_embeddings, maxval=1.0 / num_embeddings)

    # tile_l_max=256 makes the demo L=512 run two L-tiles per latent dim, so the
    # counts/sse accumulation path across the "arbitrary" grid axis is exercised.
    fwd = jax.jit(functools.partial(vq_embedding_forward,
                                    commitment_cost=0.25, tile_l_max=256))
    q, loss, ppl = fwd(x, embedding)
    jax.block_until_ready((q, loss, ppl))

    # Correctness check against pure-JAX reference.
    q_r, loss_r, ppl_r = vq_embedding_forward_ref(x, embedding, 0.25)
    assert q.shape == (B, C, H, W) and q.dtype == jnp.float32
    assert jnp.allclose(q, q_r, atol=1e-5, rtol=1e-5)
    assert jnp.allclose(loss, loss_r, atol=1e-6, rtol=1e-4)
    assert jnp.allclose(ppl, ppl_r, atol=1e-3, rtol=1e-4)

    print("KERNEL_OK")
</pallas_src>

<mosaic_0001>
module attributes {stable_mosaic.version = 11 : i64} {
  func.func @_vq_kernel(%arg0: i32, %arg1: i32, %arg2: memref<1x8x256xf32, #tpu.memory_space<vmem>>, %arg3: memref<1x128x8xf32, #tpu.memory_space<vmem>>, %arg4: memref<1x8x256xf32, #tpu.memory_space<vmem>>, %arg5: memref<1x128x1xf32, #tpu.memory_space<vmem>>, %arg6: memref<1x1x1xf32, #tpu.memory_space<vmem>>) attributes {dimension_semantics = [#tpu.dimension_semantics<parallel>, #tpu.dimension_semantics<arbitrary>], iteration_bounds = array<i64: 2, 2>, scalar_prefetch = 0 : i64, scratch_operands = 0 : i64, tpu.core_type = #tpu.core_type<tc>, window_params = [{transform_indices = @transform_0, window_bounds = array<i64: 1, 8, 256>}, {transform_indices = @transform_1, window_bounds = array<i64: 1, 128, 8>}, {transform_indices = @transform_2, window_bounds = array<i64: 1, 8, 256>}, {transform_indices = @transform_3, window_bounds = array<i64: 1, 128, 1>}, {transform_indices = @transform_4, window_bounds = array<i64: 1, 1, 1>}]} {
    %c0_i32 = arith.constant 0 : i32
    %0 = arith.cmpi eq, %arg1, %c0_i32 : i32
    %1 = arith.extui %0 : i1 to i32
    %c0_i32_0 = arith.constant 0 : i32
    %2 = arith.cmpi ne, %1, %c0_i32_0 : i32
    scf.if %2 {
      %cst_31 = arith.constant 0.000000e+00 : f32
      %54 = vector.broadcast %cst_31 : f32 to vector<1x128x1xf32>
      %c0_32 = arith.constant 0 : index
      %c0_33 = arith.constant 0 : index
      %c0_34 = arith.constant 0 : index
      %55 = vector.load %arg5[%c0_32, %c0_33, %c0_34] : memref<1x128x1xf32, #tpu.memory_space<vmem>>, vector<1x128x1xf32>
      tpu.vector_store %arg5[%c0_32, %c0_33, %c0_34], %54 {strides = array<i32>} : memref<1x128x1xf32, #tpu.memory_space<vmem>>, vector<1x128x1xf32>,
      %cst_35 = arith.constant 0.000000e+00 : f32
      %56 = vector.broadcast %cst_35 : f32 to vector<1x1x1xf32>
      %c0_36 = arith.constant 0 : index
      %c0_37 = arith.constant 0 : index
      %c0_38 = arith.constant 0 : index
      %57 = vector.load %arg6[%c0_36, %c0_37, %c0_38] : memref<1x1x1xf32, #tpu.memory_space<vmem>>, vector<1x1x1xf32>
      tpu.vector_store %arg6[%c0_36, %c0_37, %c0_38], %56 {strides = array<i32>} : memref<1x1x1xf32, #tpu.memory_space<vmem>>, vector<1x1x1xf32>,
    } else {
    }
    %c0 = arith.constant 0 : index
    %c0_1 = arith.constant 0 : index
    %c0_2 = arith.constant 0 : index
    %3 = vector.load %arg2[%c0, %c0_1, %c0_2] : memref<1x8x256xf32, #tpu.memory_space<vmem>>, vector<1x8x256xf32>
    %4 = vector.shape_cast %3 : vector<1x8x256xf32> to vector<8x256xf32>
    %c0_3 = arith.constant 0 : index
    %c0_4 = arith.constant 0 : index
    %c0_5 = arith.constant 0 : index
    %5 = vector.load %arg3[%c0_3, %c0_4, %c0_5] : memref<1x128x8xf32, #tpu.memory_space<vmem>>, vector<1x128x8xf32>
    %6 = vector.shape_cast %5 : vector<1x128x8xf32> to vector<128x8xf32>
    %7 = arith.mulf %6, %6 : vector<128x8xf32>
    %cst = arith.constant dense<0.000000e+00> : vector<128xf32>
    %8 = vector.multi_reduction <add>, %7, %cst [1] : vector<128x8xf32> to vector<128xf32>
    %9 = vector.shape_cast %8 : vector<128xf32> to vector<128x1xf32>
    %cst_6 = arith.constant -2.000000e+00 : f32
    %10 = vector.broadcast %cst_6 : f32 to vector<128x8xf32>
    %11 = arith.mulf %6, %10 : vector<128x8xf32>
    %cst_7 = arith.constant dense<0.000000e+00> : vector<128x256xf32>
    %12 = tpu.matmul %11, %4, %cst_7 {dimension_numbers = #tpu.dot_dimension_numbers<[1], [0], [0], [1], [0, 0, 1, 1], [], []>} : vector<128x8xf32>, vector<8x256xf32>, vector<128x256xf32> -> vector<128x256xf32>
    %13 = vector.broadcast %9 : vector<128x1xf32> to vector<128x256xf32>
    %14 = arith.addf %13, %12 : vector<128x256xf32>
    %cst_8 = arith.constant dense<0x7F800000> : vector<256xf32>
    %15 = vector.multi_reduction <minimumf>, %14, %cst_8 [0] : vector<128x256xf32> to vector<256xf32>
    %16 = vector.shape_cast %15 : vector<256xf32> to vector<1x256xf32>
    %17 = tpu.iota {dimensions = array<i32: 0>} : vector<128x256xi32>
    %18 = vector.broadcast %16 : vector<1x256xf32> to vector<128x256xf32>
    %19 = arith.cmpf oeq, %14, %18 : vector<128x256xf32>
    %c128_i32 = arith.constant 128 : i32
    %20 = vector.broadcast %c128_i32 : i32 to vector<128x256xi32>
    %21 = arith.select %19, %17, %20 : vector<128x256xi1>, vector<128x256xi32>
    %cst_9 = arith.constant dense<2147483647> : vector<256xi32>
    %22 = vector.multi_reduction <minsi>, %21, %cst_9 [0] : vector<128x256xi32> to vector<256xi32>
    %23 = vector.shape_cast %22 : vector<256xi32> to vector<1x256xi32>
    %24 = vector.broadcast %23 : vector<1x256xi32> to vector<128x256xi32>
    %25 = arith.cmpi eq, %17, %24 : vector<128x256xi32>
    %26 = arith.extui %25 : vector<128x256xi1> to vector<128x256xi32>
    %27 = arith.sitofp %26 : vector<128x256xi32> to vector<128x256xf32>
    %cst_10 = arith.constant dense<0.000000e+00> : vector<8x256xf32>
    %28 = tpu.matmul %6, %27, %cst_10 {dimension_numbers = #tpu.dot_dimension_numbers<[0], [0], [1], [1], [0, 1, 1, 1], [], []>} : vector<128x8xf32>, vector<128x256xf32>, vector<8x256xf32> -> vector<8x256xf32>
    %c0_11 = arith.constant 0 : index
    %c0_12 = arith.constant 0 : index
    %c0_13 = arith.constant 0 : index
    %29 = vector.load %arg4[%c0_11, %c0_12, %c0_13] : memref<1x8x256xf32, #tpu.memory_space<vmem>>, vector<1x8x256xf32>
    %30 = vector.shape_cast %29 : vector<1x8x256xf32> to vector<8x256xf32>
    %31 = vector.shape_cast %28 : vector<8x256xf32> to vector<1x8x256xf32>
    tpu.vector_store %arg4[%c0_11, %c0_12, %c0_13], %31 {strides = array<i32>} : memref<1x8x256xf32, #tpu.memory_space<vmem>>, vector<1x8x256xf32>,
    %cst_14 = arith.constant 1.000000e+00 : f32
    %32 = vector.broadcast %cst_14 : f32 to vector<256x1xf32>
    %c0_15 = arith.constant 0 : index
    %c0_16 = arith.constant 0 : index
    %c0_17 = arith.constant 0 : index
    %33 = vector.load %arg5[%c0_15, %c0_16, %c0_17] : memref<1x128x1xf32, #tpu.memory_space<vmem>>, vector<1x128x1xf32>
    %34 = vector.shape_cast %33 : vector<1x128x1xf32> to vector<128x1xf32>
    %cst_18 = arith.constant dense<0.000000e+00> : vector<128x1xf32>
    %35 = tpu.matmul %27, %32, %cst_18 {dimension_numbers = #tpu.dot_dimension_numbers<[1], [0], [0], [1], [0, 0, 1, 1], [], []>} : vector<128x256xf32>, vector<256x1xf32>, vector<128x1xf32> -> vector<128x1xf32>
    %36 = arith.addf %34, %35 : vector<128x1xf32>
    %c0_19 = arith.constant 0 : index
    %c0_20 = arith.constant 0 : index
    %c0_21 = arith.constant 0 : index
    %37 = vector.load %arg5[%c0_19, %c0_20, %c0_21] : memref<1x128x1xf32, #tpu.memory_space<vmem>>, vector<1x128x1xf32>
    %38 = vector.shape_cast %37 : vector<1x128x1xf32> to vector<128x1xf32>
    %39 = vector.shape_cast %36 : vector<128x1xf32> to vector<1x128x1xf32>
    tpu.vector_store %arg5[%c0_19, %c0_20, %c0_21], %39 {strides = array<i32>} : memref<1x128x1xf32, #tpu.memory_space<vmem>>, vector<1x128x1xf32>,
    %40 = arith.mulf %4, %4 : vector<8x256xf32>
    %cst_22 = arith.constant dense<0.000000e+00> : vector<256xf32>
    %41 = vector.multi_reduction <add>, %40, %cst_22 [0] : vector<8x256xf32> to vector<256xf32>
    %42 = vector.shape_cast %41 : vector<256xf32> to vector<1x256xf32>
    %c0_23 = arith.constant 0 : index
    %c0_24 = arith.constant 0 : index
    %c0_25 = arith.constant 0 : index
    %43 = vector.load %arg6[%c0_23, %c0_24, %c0_25] : memref<1x1x1xf32, #tpu.memory_space<vmem>>, vector<1x1x1xf32>
    %44 = vector.shape_cast %43 : vector<1x1x1xf32> to vector<1x1xf32>
    %45 = arith.addf %42, %16 : vector<1x256xf32>
    %cst_26 = arith.constant 0.000000e+00 : f32
    %46 = vector.broadcast %cst_26 : f32 to vector<1x256xf32>
    %47 = arith.maximumf %45, %46 : vector<1x256xf32>
    %cst_27 = arith.constant dense<0.000000e+00> : vector<1xf32>
    %48 = vector.multi_reduction <add>, %47, %cst_27 [1] : vector<1x256xf32> to vector<1xf32>
    %49 = vector.shape_cast %48 : vector<1xf32> to vector<1x1xf32>
    %50 = arith.addf %44, %49 : vector<1x1xf32>
    %c0_28 = arith.constant 0 : index
    %c0_29 = arith.constant 0 : index
    %c0_30 = arith.constant 0 : index
    %51 = vector.load %arg6[%c0_28, %c0_29, %c0_30] : memref<1x1x1xf32, #tpu.memory_space<vmem>>, vector<1x1x1xf32>
    %52 = vector.shape_cast %51 : vector<1x1x1xf32> to vector<1x1xf32>
    %53 = vector.shape_cast %50 : vector<1x1xf32> to vector<1x1x1xf32>
    tpu.vector_store %arg6[%c0_28, %c0_29, %c0_30], %53 {strides = array<i32>} : memref<1x1x1xf32, #tpu.memory_space<vmem>>, vector<1x1x1xf32>,
    return
  }
  func.func @transform_0(%arg0: i32, %arg1: i32) -> (i32, i32, i32) {
    %c0_i32 = arith.constant 0 : i32
    %c0_i32_0 = arith.constant 0 : i32
    return %arg0, %c0_i32, %arg1 : i32, i32, i32
  }
  func.func @transform_1(%arg0: i32, %arg1: i32) -> (i32, i32, i32) {
    %c0_i32 = arith.constant 0 : i32
    %c0_i32_0 = arith.constant 0 : i32
    %c0_i32_1 = arith.constant 0 : i32
    return %arg0, %c0_i32, %c0_i32_0 : i32, i32, i32
  }
  func.func @transform_2(%arg0: i32, %arg1: i32) -> (i32, i32, i32) {
    %c0_i32 = arith.constant 0 : i32
    %c0_i32_0 = arith.constant 0 : i32
    return %arg0, %c0_i32, %arg1 : i32, i32, i32
  }
  func.func @transform_3(%arg0: i32, %arg1: i32) -> (i32, i32, i32) {
    %c0_i32 = arith.constant 0 : i32
    %c0_i32_0 = arith.constant 0 : i32
    %c0_i32_1 = arith.constant 0 : i32
    return %arg0, %c0_i32, %c0_i32_0 : i32, i32, i32
  }
  func.func @transform_4(%arg0: i32, %arg1: i32) -> (i32, i32, i32) {
    %c0_i32 = arith.constant 0 : i32
    %c0_i32_0 = arith.constant 0 : i32
    %c0_i32_1 = arith.constant 0 : i32
    return %arg0, %c0_i32, %c0_i32_0 : i32, i32, i32
  }
}

</mosaic_0001>

<llo_original>
// kernel: vq_embedding_forward.1
$region0: #{vq_embedding_forward.1}
  #allocation0 [shape = 'u32[]', space=smem, size = 0x4, offset = 0x4, fixed_abs, tag = 'smem constant byte address 0x4 - core index']
  #allocation1 [shape = 'u32[72,128]{1,0:T(1,128)}', space=vmem, size = 0x9000, scoped, tag = 'internal scratch']
  %s0 = inlined_call_operand.vmem [shape: f32[2,8,512], index: 0, kind: input, shape index: {}]
  %s1 = inlined_call_operand.vmem [shape: f32[2,128,8], index: 1, kind: input, shape index: {}]
  %s2 = inlined_call_operand.vmem [shape: f32[2,8,512], index: 2, kind: output, shape index: {0}]
  %s3 = inlined_call_operand.vmem [shape: f32[2,128,1], index: 3, kind: output, shape index: {1}]
  %s4 = inlined_call_operand.vmem [shape: f32[2,1,1], index: 4, kind: output, shape index: {2}]
  %5 = xla_tuple %s2, %s3, %s4
  %s6 = sld [smem:[#allocation0]]
  $region61: #{vq_embedding_forward.1} parent=0
    _
  %s8 = ssub.s32 1, %s6
  %s9 = scalar_select 0, %s8, %s6
  loop: start=0, step=1, limit=6
  $region2: #{vq_embedding_forward.1} parent=0 // loop_pre_header
    _
  $region3: #{vq_embedding_forward.1} parent=0 // loop_header
    %s11 = sphi 0, %s15
    %p12 = scmp.ge.s32.totalorder %s11, 6
    %s18 = sphi 0, %s30
    %s19 = sphi 0, %s26
    %s20 = sphi 0, %s18
    %s21 = sphi 0, %s19
    %s22 = sphi 0, %s20
    %s23 = sphi 0, %s21
    %s35 = sphi 0, %s37
    %s38 = sphi 0, %s35
    %s39 = sphi 0, %s38
    %s55 = sphi 0, %s39
    %s61 = sphi 0, %s63
    %s64 = sphi 0, %s61
    %s65 = sphi 0, %s64
    %s81 = sphi 0, %s65
    %s89 = sphi 0, %s91
    %s92 = sphi 0, %s89
    %s93 = sphi 0, %s92
    %s109 = sphi 0, %s93
    %s115 = sphi 0, %s117
    %s118 = sphi 0, %s115
    %s119 = sphi 0, %s118
    %s135 = sphi 0, %s119
    %s141 = sphi 0, %s143
    %s144 = sphi 0, %s141
    %s145 = sphi 0, %s144
    %s161 = sphi 0, %s145
  $region4: #{vq_embedding_forward.1} parent=0 // loop_header_branch
    %14 = sbr.rel (%p12) target = $region8
  $region5: #{vq_embedding_forward.1} parent=0 // loop_body
    %s16 = ssub.s32 %s11, 1
    %s17 = ssub.s32 %s11, 2
    %s24 = sadd.s32 1, %s19
    %p25 = scmp.ge.s32.totalorder %s24, 2
    %s26 = scalar_select %p25, 0, %s24
    %s27 = sadd.s32 1, %s18
    %s28 = scalar_select %p25, %s27, %s18
    %p29 = scmp.ge.s32.totalorder %s28, 2
    %s30 = scalar_select %p29, 0, %s28
    %s31 = ssub.s32 %s18, %s30
    %s32 = ssub.s32 %s19, %s26
    %s33 = sor.u32 %s31, %s32
    %p34 = scmp.eq.s32.totalorder %s33, 0
    %s36 = sadd.s32 %s35, 1
    %s37 = scalar_select %p34, %s35, %s36
    %p40 = pneg %p34
    %p41 = scmp.eq.s32.totalorder %s11, 3
    %p42 = por %p40, %p41
    %p43 = scmp.ne.s32.totalorder %s35, %s38
    %p44 = scmp.eq.s32.totalorder %s11, 0
    %p45 = por %p43, %p44
    %p46 = scmp.ne.s32.totalorder %s35, %s38
    %p47 = scmp.eq.s32.totalorder %s16, 3
    %p48 = por %p46, %p47
    %p49 = scmp.ne.s32.totalorder %s38, %s39
    %p50 = scmp.eq.s32.totalorder %s16, 0
    %p51 = por %p49, %p50
    %p52 = scmp.ne.s32.totalorder %s38, %s39
    %p53 = scmp.eq.s32.totalorder %s17, 3
    %p54 = por %p52, %p53
    %p56 = scmp.ne.s32.totalorder %s39, %s55
    %p57 = scmp.eq.s32.totalorder %s17, 0
    %p58 = por %p56, %p57
    %s59 = ssub.s32 %s18, %s30
    %p60 = scmp.eq.s32.totalorder %s59, 0
    %s62 = sadd.s32 %s61, 1
    %s63 = scalar_select %p60, %s61, %s62
    %p66 = pneg %p60
    %p67 = scmp.eq.s32.totalorder %s11, 3
    %p68 = por %p66, %p67
    %p69 = scmp.ne.s32.totalorder %s61, %s64
    %p70 = scmp.eq.s32.totalorder %s11, 0
    %p71 = por %p69, %p70
    %p72 = scmp.ne.s32.totalorder %s61, %s64
    %p73 = scmp.eq.s32.totalorder %s16, 3
    %p74 = por %p72, %p73
    %p75 = scmp.ne.s32.totalorder %s64, %s65
    %p76 = scmp.eq.s32.totalorder %s16, 0
    %p77 = por %p75, %p76
    %p78 = scmp.ne.s32.totalorder %s64, %s65
    %p79 = scmp.eq.s32.totalorder %s17, 3
    %p80 = por %p78, %p79
    %p82 = scmp.ne.s32.totalorder %s65, %s81
    %p83 = scmp.eq.s32.totalorder %s17, 0
    %p84 = por %p82, %p83
    %s85 = ssub.s32 %s18, %s30
    %s86 = ssub.s32 %s19, %s26
    %s87 = sor.u32 %s85, %s86
    %p88 = scmp.eq.s32.totalorder %s87, 0
    %s90 = sadd.s32 %s89, 1
    %s91 = scalar_select %p88, %s89, %s90
    %p94 = pneg %p88
    %p95 = scmp.eq.s32.totalorder %s11, 3
    %p96 = por %p94, %p95
    %p97 = scmp.ne.s32.totalorder %s89, %s92
    %p98 = scmp.eq.s32.totalorder %s11, 0
    %p99 = por %p97, %p98
    %p100 = scmp.ne.s32.totalorder %s89, %s92
    %p101 = scmp.eq.s32.totalorder %s16, 3
    %p102 = por %p100, %p101
    %p103 = scmp.ne.s32.totalorder %s92, %s93
    %p104 = scmp.eq.s32.totalorder %s16, 0
    %p105 = por %p103, %p104
    %p106 = scmp.ne.s32.totalorder %s92, %s93
    %p107 = scmp.eq.s32.totalorder %s17, 3
    %p108 = por %p106, %p107
    %p110 = scmp.ne.s32.totalorder %s93, %s109
    %p111 = scmp.eq.s32.totalorder %s17, 0
    %p112 = por %p110, %p111
    %s113 = ssub.s32 %s18, %s30
    %p114 = scmp.eq.s32.totalorder %s113, 0
    %s116 = sadd.s32 %s115, 1
    %s117 = scalar_select %p114, %s115, %s116
    %p120 = pneg %p114
    %p121 = scmp.eq.s32.totalorder %s11, 3
    %p122 = por %p120, %p121
    %p123 = scmp.ne.s32.totalorder %s115, %s118
    %p124 = scmp.eq.s32.totalorder %s11, 0
    %p125 = por %p123, %p124
    %p126 = scmp.ne.s32.totalorder %s115, %s118
    %p127 = scmp.eq.s32.totalorder %s16, 3
    %p128 = por %p126, %p127
    %p129 = scmp.ne.s32.totalorder %s118, %s119
    %p130 = scmp.eq.s32.totalorder %s16, 0
    %p131 = por %p129, %p130
    %p132 = scmp.ne.s32.totalorder %s118, %s119
    %p133 = scmp.eq.s32.totalorder %s17, 3
    %p134 = por %p132, %p133
    %p136 = scmp.ne.s32.totalorder %s119, %s135
    %p137 = scmp.eq.s32.totalorder %s17, 0
    %p138 = por %p136, %p137
    %s139 = ssub.s32 %s18, %s30
    %p140 = scmp.eq.s32.totalorder %s139, 0
    %s142 = sadd.s32 %s141, 1
    %s143 = scalar_select %p140, %s141, %s142
    %p146 = pneg %p140
    %p147 = scmp.eq.s32.totalorder %s11, 3
    %p148 = por %p146, %p147
    %p149 = scmp.ne.s32.totalorder %s141, %s144
    %p150 = scmp.eq.s32.totalorder %s11, 0
    %p151 = por %p149, %p150
    %p152 = scmp.ne.s32.totalorder %s141, %s144
    %p153 = scmp.eq.s32.totalorder %s16, 3
    %p154 = por %p152, %p153
    %p155 = scmp.ne.s32.totalorder %s144, %s145
    %p156 = scmp.eq.s32.totalorder %s16, 0
    %p157 = por %p155, %p156
    %p158 = scmp.ne.s32.totalorder %s144, %s145
    %p159 = scmp.eq.s32.totalorder %s17, 3
    %p160 = por %p158, %p159
    %p162 = scmp.ne.s32.totalorder %s145, %s161
    %p163 = scmp.eq.s32.totalorder %s17, 0
    %p164 = por %p162, %p163
    %p165 = scmp.le.s32.totalorder 1, %s11
    %p166 = scmp.lt.s32.totalorder %s11, 5
    %p167 = pnand %p165, %p166
    %p168 = pneg %p167
    // Predicated region
    $region9: #{vq_embedding_forward.1} parent=5 // pred_check
      _
    $region10: #{vq_embedding_forward.1} parent=5 // pred_check_branch
      %170 = sbr.rel (%p167) target = $region12
    $region11: #{vq_embedding_forward.1} parent=5 // pred_region
      %s171 = ssub.s32 %s11, 1
    $region12: #{vq_embedding_forward.1} parent=5 // pred_fallthru
      _
    %p172 = scmp.lt.s32.totalorder %s11, 4
    // Predicated region
    $region13: #{vq_embedding_forward.1} parent=5 // pred_check
      %p173 = pneg %p172
    $region14: #{vq_embedding_forward.1} parent=5 // pred_check_branch
      %175 = sbr.rel (%p173) target = $region16
    $region15: #{vq_embedding_forward.1} parent=5 // pred_region
      // Predicated region
      $region17: #{vq_embedding_forward.1} parent=15 // pred_check
        %p176 = pneg %p45
      $region18: #{vq_embedding_forward.1} parent=15 // pred_check_branch
        %178 = sbr.rel (%p176) target = $region20
      $region19: #{vq_embedding_forward.1} parent=15 // pred_region
        %s179 = smul.u32 2, %s19
        %p180 = scmp.lt.s32.totalorder %s18, 1
        %s181 = scalar_select %p180, %s18, 1
        %p182 = scmp.lt.s32.totalorder %s179, 3
        %s183 = scalar_select %p182, %s179, 3
        %s184 = smul.addr %s181, 4
        %s185 = sadd.s32 %s183, %s184
        %s186 = smul.addr %s185, 8
        %s187 = scalar_lea.vmem %s0, %s186
        %s188 = smul.u32 2, %s19
      $region20: #{vq_embedding_forward.1} parent=15 // pred_fallthru
        _
      // Predicated region
      $region21: #{vq_embedding_forward.1} parent=15 // pred_check
        %p189 = pneg %p71
      $region22: #{vq_embedding_forward.1} parent=15 // pred_check_branch
        %191 = sbr.rel (%p189) target = $region24
      $region23: #{vq_embedding_forward.1} parent=15 // pred_region
        %p192 = scmp.lt.s32.totalorder %s18, 1
        %s193 = scalar_select %p192, %s18, 1
        %s194 = smul.addr %s193, 16
        %s195 = smul.addr %s194, 8
        %s196 = scalar_lea.vmem %s1, %s195
      $region24: #{vq_embedding_forward.1} parent=15 // pred_fallthru
        _
    $region16: #{vq_embedding_forward.1} parent=5 // pred_fallthru
      _
    %p197 = scmp.le.s32.totalorder 1, %s11
    %p198 = scmp.lt.s32.totalorder %s11, 5
    %p199 = pnand %p197, %p198
    %p200 = pneg %p199
    // Predicated region
    $region25: #{vq_embedding_forward.1} parent=5 // pred_check
      _
    $region26: #{vq_embedding_forward.1} parent=5 // pred_check_branch
      %202 = sbr.rel (%p199) target = $region28
    $region27: #{vq_embedding_forward.1} parent=5 // pred_region
      %s203 = ssub.s32 %s11, 1
      %s204 = smul.u32 2, %s21
      %p205 = scmp.lt.s32.totalorder %s20, 1
      %s206 = scalar_select %p205, %s20, 1
      %p207 = scmp.lt.s32.totalorder %s204, 3
      %s208 = scalar_select %p207, %s204, 3
      %s209 = smul.addr %s206, 4
      %s210 = sadd.s32 %s208, %s209
      %s211 = smul.addr %s210, 8
      %s212 = scalar_lea.vmem %s0, %s211
      %p213 = pneg %p51
      %p214 = pneg %p48
      %p215 = scmp.lt.s32.totalorder %s20, 1
      %s216 = scalar_select %p215, %s20, 1
      %s217 = smul.addr %s216, 16
      %s218 = smul.addr %s217, 8
      %s219 = scalar_lea.vmem %s1, %s218
      %p220 = pneg %p77
      %p221 = pneg %p74
      %p222 = pneg %p105
      %p223 = pneg %p102
      %s224 = smul.u32 2, %s21
      %p225 = scmp.lt.s32.totalorder %s20, 1
      %s226 = scalar_select %p225, %s20, 1
      %p227 = scmp.lt.s32.totalorder %s224, 3
      %s228 = scalar_select %p227, %s224, 3
      %s229 = smul.addr %s226, 4
      %s230 = sadd.s32 %s228, %s229
      %s231 = smul.addr %s230, 8
      %s232 = scalar_lea.vmem %s2, %s231
      %p233 = pneg %p131
      %p234 = pneg %p128
      %p235 = scmp.lt.s32.totalorder %s20, 1
      %s236 = scalar_select %p235, %s20, 1
      %s237 = smul.addr %s236, 16
      %s238 = smul.addr %s237, 8
      %s239 = scalar_lea.vmem %s3, %s238
      %p240 = pneg %p157
      %p241 = pneg %p154
      %p242 = scmp.lt.s32.totalorder %s20, 1
      %s243 = scalar_select %p242, %s20, 1
      %s244 = scalar_lea.vmem %s4, %s243
      %s245 = smul.u32 2, %s21
      %p246 = scmp.lt.s32.totalorder %s20, 1
      %s247 = scalar_select %p246, %s20, 1
      %p248 = scmp.lt.s32.totalorder %s245, 3
      %s249 = scalar_select %p248, %s245, 3
      %s250 = smul.addr %s247, 4
      %s251 = sadd.s32 %s249, %s250
      %s252 = smul.addr %s251, 8
      %s253 = scalar_lea.vmem %s0, %s252
      %s254 = smul.u32 2, %s21
      %p255 = scmp.lt.s32.totalorder %s20, 1
      %s256 = scalar_select %p255, %s20, 1
      %s257 = smul.addr %s256, 16
      %s258 = smul.addr %s257, 8
      %s259 = scalar_lea.vmem %s1, %s258
      %s260 = smul.u32 2, %s21
      %p261 = scmp.lt.s32.totalorder %s20, 1
      %s262 = scalar_select %p261, %s20, 1
      %p263 = scmp.lt.s32.totalorder %s260, 3
      %s264 = scalar_select %p263, %s260, 3
      %s265 = smul.addr %s262, 4
      %s266 = sadd.s32 %s264, %s265
      %s267 = smul.addr %s266, 8
      %s268 = scalar_lea.vmem %s2, %s267
      %s269 = smul.u32 2, %s21
      %p270 = scmp.lt.s32.totalorder %s20, 1
      %s271 = scalar_select %p270, %s20, 1
      %s272 = smul.addr %s271, 16
      %s273 = smul.addr %s272, 8
      %s274 = scalar_lea.vmem %s3, %s273
      %p275 = scmp.lt.s32.totalorder %s20, 1
      %s276 = scalar_select %p275, %s20, 1
      %s277 = scalar_lea.vmem %s4, %s276
      %p278 = scmp.eq.s32.totalorder %s21, 0
      // Predicated region
      $region29: #{vq_embedding_forward.1} parent=27 // pred_check
        %p279 = pneg %p278
      $region30: #{vq_embedding_forward.1} parent=27 // pred_check_branch
        %281 = sbr.rel (%p279) target = $region32
      $region31: #{vq_embedding_forward.1} parent=27 // pred_region
        %vm282 = vcmask 7168
        %283 = vst.msk [vmem:[%s274] sm:$0xff] %vm282, 0.0
        %284 = vst.msk [vmem:[%s274 + $0x8] sm:$0xff] %vm282, 0.0
        %285 = vst.msk [vmem:[%s274 + $0x10] sm:$0xff] %vm282, 0.0
        %286 = vst.msk [vmem:[%s274 + $0x18] sm:$0xff] %vm282, 0.0
        %287 = vst.msk [vmem:[%s274 + $0x20] sm:$0xff] %vm282, 0.0
        %288 = vst.msk [vmem:[%s274 + $0x28] sm:$0xff] %vm282, 0.0
        %289 = vst.msk [vmem:[%s274 + $0x30] sm:$0xff] %vm282, 0.0
        %290 = vst.msk [vmem:[%s274 + $0x38] sm:$0xff] %vm282, 0.0
        %291 = vst.msk [vmem:[%s274 + $0x40] sm:$0xff] %vm282, 0.0
        %292 = vst.msk [vmem:[%s274 + $0x48] sm:$0xff] %vm282, 0.0
        %293 = vst.msk [vmem:[%s274 + $0x50] sm:$0xff] %vm282, 0.0
        %294 = vst.msk [vmem:[%s274 + $0x58] sm:$0xff] %vm282, 0.0
        %295 = vst.msk [vmem:[%s274 + $0x60] sm:$0xff] %vm282, 0.0
        %296 = vst.msk [vmem:[%s274 + $0x68] sm:$0xff] %vm282, 0.0
        %297 = vst.msk [vmem:[%s274 + $0x70] sm:$0xff] %vm282, 0.0
        %298 = vst.msk [vmem:[%s274 + $0x78] sm:$0xff] %vm282, 0.0
        %vm299 = vcmask 0
        %300 = vst.msk [vmem:[%s277] sm:$0x1] %vm299, 0.0
      $region32: #{vq_embedding_forward.1} parent=27 // pred_fallthru
        _
      %v301 = vld [vmem:[%s253] sm:$0xff]
      %v302 = vld [vmem:[%s253 + $0x8] sm:$0xff]
      %v303 = vld [vmem:[%s259] sm:$0xff]
      %v304 = vld [vmem:[%s259 + $0x8] sm:$0xff]
      %v305 = vld [vmem:[%s259 + $0x10] sm:$0xff]
      %v306 = vld [vmem:[%s259 + $0x18] sm:$0xff]
      %v307 = vld [vmem:[%s259 + $0x20] sm:$0xff]
      %v308 = vld [vmem:[%s259 + $0x28] sm:$0xff]
      %v309 = vld [vmem:[%s259 + $0x30] sm:$0xff]
      %v310 = vld [vmem:[%s259 + $0x38] sm:$0xff]
      %v311 = vld [vmem:[%s259 + $0x40] sm:$0xff]
      %v312 = vld [vmem:[%s259 + $0x48] sm:$0xff]
      %v313 = vld [vmem:[%s259 + $0x50] sm:$0xff]
      %v314 = vld [vmem:[%s259 + $0x58] sm:$0xff]
      %v315 = vld [vmem:[%s259 + $0x60] sm:$0xff]
      %v316 = vld [vmem:[%s259 + $0x68] sm:$0xff]
      %v317 = vld [vmem:[%s259 + $0x70] sm:$0xff]
      %v318 = vld [vmem:[%s259 + $0x78] sm:$0xff]
      %v319 = vmul.f32 %v303, %v303
      %v320 = vmul.f32 %v304, %v304
      %v321 = vmul.f32 %v305, %v305
      %v322 = vmul.f32 %v306, %v306
      %v323 = vmul.f32 %v307, %v307
      %v324 = vmul.f32 %v308, %v308
      %v325 = vmul.f32 %v309, %v309
      %v326 = vmul.f32 %v310, %v310
      %v327 = vmul.f32 %v311, %v311
      %v328 = vmul.f32 %v312, %v312
      %v329 = vmul.f32 %v313, %v313
      %v330 = vmul.f32 %v314, %v314
      %v331 = vmul.f32 %v315, %v315
      %v332 = vmul.f32 %v316, %v316
      %v333 = vmul.f32 %v317, %v317
      %v334 = vmul.f32 %v318, %v318
      %vm335 = vcmask 64512
      %v336 = vsel %vm335, %v319, 0.0
      %337 = vadd.xlane.f32.xlu0 %v336
      %v338 = vpop.xlane.xlu0 %337
      %v339 = vsel %vm335, %v320, 0.0
      %340 = vadd.xlane.f32.xlu0 %v339
      %v341 = vpop.xlane.xlu0 %340
      %v342 = vsel %vm335, %v321, 0.0
      %343 = vadd.xlane.f32.xlu0 %v342
      %v344 = vpop.xlane.xlu0 %343
      %v345 = vsel %vm335, %v322, 0.0
      %346 = vadd.xlane.f32.xlu0 %v345
      %v347 = vpop.xlane.xlu0 %346
      %v348 = vsel %vm335, %v323, 0.0
      %349 = vadd.xlane.f32.xlu0 %v348
      %v350 = vpop.xlane.xlu0 %349
      %v351 = vsel %vm335, %v324, 0.0
      %352 = vadd.xlane.f32.xlu0 %v351
      %v353 = vpop.xlane.xlu0 %352
      %v354 = vsel %vm335, %v325, 0.0
      %355 = vadd.xlane.f32.xlu0 %v354
      %v356 = vpop.xlane.xlu0 %355
      %v357 = vsel %vm335, %v326, 0.0
      %358 = vadd.xlane.f32.xlu0 %v357
      %v359 = vpop.xlane.xlu0 %358
      %v360 = vsel %vm335, %v327, 0.0
      %361 = vadd.xlane.f32.xlu0 %v360
      %v362 = vpop.xlane.xlu0 %361
      %v363 = vsel %vm335, %v328, 0.0
      %364 = vadd.xlane.f32.xlu0 %v363
      %v365 = vpop.xlane.xlu0 %364
      %v366 = vsel %vm335, %v329, 0.0
      %367 = vadd.xlane.f32.xlu0 %v366
      %v368 = vpop.xlane.xlu0 %367
      %v369 = vsel %vm335, %v330, 0.0
      %370 = vadd.xlane.f32.xlu0 %v369
      %v371 = vpop.xlane.xlu0 %370
      %v372 = vsel %vm335, %v331, 0.0
      %373 = vadd.xlane.f32.xlu0 %v372
      %v374 = vpop.xlane.xlu0 %373
      %v375 = vsel %vm335, %v332, 0.0
      %376 = vadd.xlane.f32.xlu0 %v375
      %v377 = vpop.xlane.xlu0 %376
      %v378 = vsel %vm335, %v333, 0.0
      %379 = vadd.xlane.f32.xlu0 %v378
      %v380 = vpop.xlane.xlu0 %379
      %v381 = vsel %vm335, %v334, 0.0
      %382 = vadd.xlane.f32.xlu0 %v381
      %v383 = vpop.xlane.xlu0 %382
      %v384 = vmul.f32 %v303, -2.0
      %v385 = vmul.f32 %v304, -2.0
      %v386 = vmul.f32 %v305, -2.0
      %v387 = vmul.f32 %v306, -2.0
      %v388 = vmul.f32 %v307, -2.0
      %v389 = vmul.f32 %v308, -2.0
      %v390 = vmul.f32 %v309, -2.0
      %v391 = vmul.f32 %v310, -2.0
      %v392 = vmul.f32 %v311, -2.0
      %v393 = vmul.f32 %v312, -2.0
      %v394 = vmul.f32 %v313, -2.0
      %v395 = vmul.f32 %v314, -2.0
      %v396 = vmul.f32 %v315, -2.0
      %v397 = vmul.f32 %v316, -2.0
      %v398 = vmul.f32 %v317, -2.0
      %v399 = vmul.f32 %v318, -2.0
      %v401 = vsel %vm335, %v384, 0
      %v404 = vsel %vm335, %v385, 0
      %v407 = vsel %vm335, %v386, 0
      %v410 = vsel %vm335, %v387, 0
      %v413 = vsel %vm335, %v388, 0
      %v416 = vsel %vm335, %v389, 0
      %v419 = vsel %vm335, %v390, 0
      %v422 = vsel %vm335, %v391, 0
      %v425 = vsel %vm335, %v392, 0
      %v428 = vsel %vm335, %v393, 0
      %v431 = vsel %vm335, %v394, 0
      %v434 = vsel %vm335, %v395, 0
      %v437 = vsel %vm335, %v396, 0
      %v440 = vsel %vm335, %v397, 0
      %v443 = vsel %vm335, %v398, 0
      %v446 = vsel %vm335, %v399, 0
      %448 = vmatpush.msra.mxu0 0.0
      %449 = vmatpush.msra.mxu0 0.0
      %450 = vmatpush.msra.mxu0 0.0
      %451 = vmatpush.msra.mxu0 0.0
      %452 = vmatpush.msra.mxu0 0.0
      %453 = vmatpush.msra.mxu0 0.0
      %454 = vmatpush.msra.mxu0 0.0
      %455 = vmatpush.msra.mxu0 0.0
      %456 = vmatpush.msra.mxu0 0.0
      %457 = vmatpush.msra.mxu0 0.0
      %458 = vmatpush.msra.mxu0 0.0
      %459 = vmatpush.msra.mxu0 0.0
      %460 = vmatpush.msra.mxu0 0.0
      %461 = vmatpush.msra.mxu0 0.0
      %462 = vmatpush.msra.mxu0 0.0
      %463 = vmatpush.msra.mxu0 %v301
      %464 = vmatmul.f32.gmra.mxu0 %v401
      %v465 = vpop.f32.mrf.mxu0
      %v466 = vadd.f32 0.0, %v465
      %467 = vmatmul.f32.gmra.mxu0 %v404
      %v468 = vpop.f32.mrf.mxu0
      %v469 = vadd.f32 0.0, %v468
      %470 = vmatmul.f32.gmra.mxu0 %v407
      %v471 = vpop.f32.mrf.mxu0
      %v472 = vadd.f32 0.0, %v471
      %473 = vmatmul.f32.gmra.mxu0 %v410
      %v474 = vpop.f32.mrf.mxu0
      %v475 = vadd.f32 0.0, %v474
      %476 = vmatmul.f32.gmra.mxu0 %v413
      %v477 = vpop.f32.mrf.mxu0
      %v478 = vadd.f32 0.0, %v477
      %479 = vmatmul.f32.gmra.mxu0 %v416
      %v480 = vpop.f32.mrf.mxu0
      %v481 = vadd.f32 0.0, %v480
      %482 = vmatmul.f32.gmra.mxu0 %v419
      %v483 = vpop.f32.mrf.mxu0
      %v484 = vadd.f32 0.0, %v483
      %485 = vmatmul.f32.gmra.mxu0 %v422
      %v486 = vpop.f32.mrf.mxu0
      %v487 = vadd.f32 0.0, %v486
      %488 = vmatmul.f32.gmra.mxu0 %v425
      %v489 = vpop.f32.mrf.mxu0
      %v490 = vadd.f32 0.0, %v489
      %491 = vmatmul.f32.gmra.mxu0 %v428
      %v492 = vpop.f32.mrf.mxu0
      %v493 = vadd.f32 0.0, %v492
      %494 = vmatmul.f32.gmra.mxu0 %v431
      %v495 = vpop.f32.mrf.mxu0
      %v496 = vadd.f32 0.0, %v495
      %497 = vmatmul.f32.gmra.mxu0 %v434
      %v498 = vpop.f32.mrf.mxu0
      %v499 = vadd.f32 0.0, %v498
      %500 = vmatmul.f32.gmra.mxu0 %v437
      %v501 = vpop.f32.mrf.mxu0
      %v502 = vadd.f32 0.0, %v501
      %503 = vmatmul.f32.gmra.mxu0 %v440
      %v504 = vpop.f32.mrf.mxu0
      %v505 = vadd.f32 0.0, %v504
      %506 = vmatmul.f32.gmra.mxu0 %v443
      %v507 = vpop.f32.mrf.mxu0
      %v508 = vadd.f32 0.0, %v507
      %509 = vmatmul.f32.gmra.mxu0 %v446
      %v510 = vpop.f32.mrf.mxu0
      %v511 = vadd.f32 0.0, %v510
      %512 = vdwg.mxu0
      %513 = vmatpush.msra.mxu0 0.0
      %514 = vmatpush.msra.mxu0 0.0
      %515 = vmatpush.msra.mxu0 0.0
      %516 = vmatpush.msra.mxu0 0.0
      %517 = vmatpush.msra.mxu0 0.0
      %518 = vmatpush.msra.mxu0 0.0
      %519 = vmatpush.msra.mxu0 0.0
      %520 = vmatpush.msra.mxu0 0.0
      %521 = vmatpush.msra.mxu0 0.0
      %522 = vmatpush.msra.mxu0 0.0
      %523 = vmatpush.msra.mxu0 0.0
      %524 = vmatpush.msra.mxu0 0.0
      %525 = vmatpush.msra.mxu0 0.0
      %526 = vmatpush.msra.mxu0 0.0
      %527 = vmatpush.msra.mxu0 0.0
      %528 = vmatpush.msra.mxu0 %v302
      %529 = vmatmul.f32.gmra.mxu0 %v401
      %v530 = vpop.f32.mrf.mxu0
      %v531 = vadd.f32 0.0, %v530
      %532 = vmatmul.f32.gmra.mxu0 %v404
      %v533 = vpop.f32.mrf.mxu0
      %v534 = vadd.f32 0.0, %v533
      %535 = vmatmul.f32.gmra.mxu0 %v407
      %v536 = vpop.f32.mrf.mxu0
      %v537 = vadd.f32 0.0, %v536
      %538 = vmatmul.f32.gmra.mxu0 %v410
      %v539 = vpop.f32.mrf.mxu0
      %v540 = vadd.f32 0.0, %v539
      %541 = vmatmul.f32.gmra.mxu0 %v413
      %v542 = vpop.f32.mrf.mxu0
      %v543 = vadd.f32 0.0, %v542
      %544 = vmatmul.f32.gmra.mxu0 %v416
      %v545 = vpop.f32.mrf.mxu0
      %v546 = vadd.f32 0.0, %v545
      %547 = vmatmul.f32.gmra.mxu0 %v419
      %v548 = vpop.f32.mrf.mxu0
      %v549 = vadd.f32 0.0, %v548
      %550 = vmatmul.f32.gmra.mxu0 %v422
      %v551 = vpop.f32.mrf.mxu0
      %v552 = vadd.f32 0.0, %v551
      %553 = vmatmul.f32.gmra.mxu0 %v425
      %v554 = vpop.f32.mrf.mxu0
      %v555 = vadd.f32 0.0, %v554
      %556 = vmatmul.f32.gmra.mxu0 %v428
      %v557 = vpop.f32.mrf.mxu0
      %v558 = vadd.f32 0.0, %v557
      %559 = vmatmul.f32.gmra.mxu0 %v431
      %v560 = vpop.f32.mrf.mxu0
      %v561 = vadd.f32 0.0, %v560
      %562 = vmatmul.f32.gmra.mxu0 %v434
      %v563 = vpop.f32.mrf.mxu0
      %v564 = vadd.f32 0.0, %v563
      %565 = vmatmul.f32.gmra.mxu0 %v437
      %v566 = vpop.f32.mrf.mxu0
      %v567 = vadd.f32 0.0, %v566
      %568 = vmatmul.f32.gmra.mxu0 %v440
      %v569 = vpop.f32.mrf.mxu0
      %v570 = vadd.f32 0.0, %v569
      %571 = vmatmul.f32.gmra.mxu0 %v443
      %v572 = vpop.f32.mrf.mxu0
      %v573 = vadd.f32 0.0, %v572
      %574 = vmatmul.f32.gmra.mxu0 %v446
      %v575 = vpop.f32.mrf.mxu0
      %v576 = vadd.f32 0.0, %v575
      %577 = vdwg.mxu0
      %v578 = vadd.f32 %v338, %v466
      %v579 = vadd.f32 %v338, %v531
      %v580 = vadd.f32 %v341, %v469
      %v581 = vadd.f32 %v341, %v534
      %v582 = vadd.f32 %v344, %v472
      %v583 = vadd.f32 %v344, %v537
      %v584 = vadd.f32 %v347, %v475
      %v585 = vadd.f32 %v347, %v540
      %v586 = vadd.f32 %v350, %v478
      %v587 = vadd.f32 %v350, %v543
      %v588 = vadd.f32 %v353, %v481
      %v589 = vadd.f32 %v353, %v546
      %v590 = vadd.f32 %v356, %v484
      %v591 = vadd.f32 %v356, %v549
      %v592 = vadd.f32 %v359, %v487
      %v593 = vadd.f32 %v359, %v552
      %v594 = vadd.f32 %v362, %v490
      %v595 = vadd.f32 %v362, %v555
      %v596 = vadd.f32 %v365, %v493
      %v597 = vadd.f32 %v365, %v558
      %v598 = vadd.f32 %v368, %v496
      %v599 = vadd.f32 %v368, %v561
      %v600 = vadd.f32 %v371, %v499
      %v601 = vadd.f32 %v371, %v564
      %v602 = vadd.f32 %v374, %v502
      %v603 = vadd.f32 %v374, %v567
      %v604 = vadd.f32 %v377, %v505
      %v605 = vadd.f32 %v377, %v570
      %v606 = vadd.f32 %v380, %v508
      %v607 = vadd.f32 %v380, %v573
      %v608 = vadd.f32 %v383, %v511
      %v609 = vadd.f32 %v383, %v576
      %v610 = vmin.f32 %v578, %v582
      %v611 = vmin.f32 %v580, %v584
      %v612 = vmin.f32 %v610, %v586
      %v613 = vmin.f32 %v611, %v588
      %v614 = vmin.f32 %v612, %v590
      %v615 = vmin.f32 %v613, %v592
      %v616 = vmin.f32 %v614, %v594
      %v617 = vmin.f32 %v615, %v596
      %v618 = vmin.f32 %v616, %v598
      %v619 = vmin.f32 %v617, %v600
      %v620 = vmin.f32 %v618, %v602
      %v621 = vmin.f32 %v619, %v604
      %v622 = vmin.f32 %v620, %v606
      %v623 = vmin.f32 %v621, %v608
      %v624 = vmin.f32 %v622, %v623
      %v625 = vrot.slane %v624, 4
      %v626 = vmin.f32 %v624, %v625
      %v627 = vrot.slane %v626, 2
      %v628 = vmin.f32 %v626, %v627
      %v629 = vrot.slane %v628, 1
      %v630 = vmin.f32 %v628, %v629
      %v631 = vmin.f32 %v579, %v583
      %v632 = vmin.f32 %v581, %v585
      %v633 = vmin.f32 %v631, %v587
      %v634 = vmin.f32 %v632, %v589
      %v635 = vmin.f32 %v633, %v591
      %v636 = vmin.f32 %v634, %v593
      %v637 = vmin.f32 %v635, %v595
      %v638 = vmin.f32 %v636, %v597
      %v639 = vmin.f32 %v637, %v599
      %v640 = vmin.f32 %v638, %v601
      %v641 = vmin.f32 %v639, %v603
      %v642 = vmin.f32 %v640, %v605
      %v643 = vmin.f32 %v641, %v607
      %v644 = vmin.f32 %v642, %v609
      %v645 = vmin.f32 %v643, %v644
      %v646 = vrot.slane %v645, 4
      %v647 = vmin.f32 %v645, %v646
      %v648 = vrot.slane %v647, 2
      %v649 = vmin.f32 %v647, %v648
      %v650 = vrot.slane %v649, 1
      %v651 = vmin.f32 %v649, %v650
      %v652 = vlaneseq
      %v653 = vshrl.u32 %v652, 7
      %v654 = vadd.s32 %v653, 8
      %v655 = vadd.s32 %v653, 16
      %v656 = vadd.s32 %v653, 24
      %v657 = vadd.s32 %v653, 32
      %v658 = vadd.s32 %v653, 40
      %v659 = vadd.s32 %v653, 48
      %v660 = vadd.s32 %v653, 56
      %v661 = vadd.s32 %v653, 64
      %v662 = vadd.s32 %v653, 72
      %v663 = vadd.s32 %v653, 80
      %v664 = vadd.s32 %v653, 88
      %v665 = vadd.s32 %v653, 96
      %v666 = vadd.s32 %v653, 104
      %v667 = vadd.s32 %v653, 112
      %v668 = vadd.s32 %v653, 120
      %vm669 = vcmp.eq.f32.partialorder %v578, %v630
      %vm670 = vcmp.eq.f32.partialorder %v579, %v651
      %vm671 = vcmp.eq.f32.partialorder %v580, %v630
      %vm672 = vcmp.eq.f32.partialorder %v581, %v651
      %vm673 = vcmp.eq.f32.partialorder %v582, %v630
      %vm674 = vcmp.eq.f32.partialorder %v583, %v651
      %vm675 = vcmp.eq.f32.partialorder %v584, %v630
      %vm676 = vcmp.eq.f32.partialorder %v585, %v651
      %vm677 = vcmp.eq.f32.partialorder %v586, %v630
      %vm678 = vcmp.eq.f32.partialorder %v587, %v651
      %vm679 = vcmp.eq.f32.partialorder %v588, %v630
      %vm680 = vcmp.eq.f32.partialorder %v589, %v651
      %vm681 = vcmp.eq.f32.partialorder %v590, %v630
      %vm682 = vcmp.eq.f32.partialorder %v591, %v651
      %vm683 = vcmp.eq.f32.partialorder %v592, %v630
      %vm684 = vcmp.eq.f32.partialorder %v593, %v651
      %vm685 = vcmp.eq.f32.partialorder %v594, %v630
      %vm686 = vcmp.eq.f32.partialorder %v595, %v651
      %vm687 = vcmp.eq.f32.partialorder %v596, %v630
      %vm688 = vcmp.eq.f32.partialorder %v597, %v651
      %vm689 = vcmp.eq.f32.partialorder %v598, %v630
      %vm690 = vcmp.eq.f32.partialorder %v599, %v651
      %vm691 = vcmp.eq.f32.partialorder %v600, %v630
      %vm692 = vcmp.eq.f32.partialorder %v601, %v651
      %vm693 = vcmp.eq.f32.partialorder %v602, %v630
      %vm694 = vcmp.eq.f32.partialorder %v603, %v651
      %vm695 = vcmp.eq.f32.partialorder %v604, %v630
      %vm696 = vcmp.eq.f32.partialorder %v605, %v651
      %vm697 = vcmp.eq.f32.partialorder %v606, %v630
      %vm698 = vcmp.eq.f32.partialorder %v607, %v651
      %vm699 = vcmp.eq.f32.partialorder %v608, %v630
      %vm700 = vcmp.eq.f32.partialorder %v609, %v651
      %v701 = vsel %vm669, %v653, 128
      %v702 = vsel %vm670, %v653, 128
      %v703 = vsel %vm671, %v654, 128
      %v704 = vsel %vm672, %v654, 128
      %v705 = vsel %vm673, %v655, 128
      %v706 = vsel %vm674, %v655, 128
      %v707 = vsel %vm675, %v656, 128
      %v708 = vsel %vm676, %v656, 128
      %v709 = vsel %vm677, %v657, 128
      %v710 = vsel %vm678, %v657, 128
      %v711 = vsel %vm679, %v658, 128
      %v712 = vsel %vm680, %v658, 128
      %v713 = vsel %vm681, %v659, 128
      %v714 = vsel %vm682, %v659, 128
      %v715 = vsel %vm683, %v660, 128
      %v716 = vsel %vm684, %v660, 128
      %v717 = vsel %vm685, %v661, 128
      %v718 = vsel %vm686, %v661, 128
      %v719 = vsel %vm687, %v662, 128
      %v720 = vsel %vm688, %v662, 128
      %v721 = vsel %vm689, %v663, 128
      %v722 = vsel %vm690, %v663, 128
      %v723 = vsel %vm691, %v664, 128
      %v724 = vsel %vm692, %v664, 128
      %v725 = vsel %vm693, %v665, 128
      %v726 = vsel %vm694, %v665, 128
      %v727 = vsel %vm695, %v666, 128
      %v728 = vsel %vm696, %v666, 128
      %v729 = vsel %vm697, %v667, 128
      %v730 = vsel %vm698, %v667, 128
      %v731 = vsel %vm699, %v668, 128
      %v732 = vsel %vm700, %v668, 128
      %vm733 = vcmp.lt.s32.totalorder %v701, %v705
      %v734 = vsel %vm733, %v701, %v705
      %vm735 = vcmp.lt.s32.totalorder %v703, %v707
      %v736 = vsel %vm735, %v703, %v707
      %vm737 = vcmp.lt.s32.totalorder %v734, %v709
      %v738 = vsel %vm737, %v734, %v709
      %vm739 = vcmp.lt.s32.totalorder %v736, %v711
      %v740 = vsel %vm739, %v736, %v711
      %vm741 = vcmp.lt.s32.totalorder %v738, %v713
      %v742 = vsel %vm741, %v738, %v713
      %vm743 = vcmp.lt.s32.totalorder %v740, %v715
      %v744 = vsel %vm743, %v740, %v715
      %vm745 = vcmp.lt.s32.totalorder %v742, %v717
      %v746 = vsel %vm745, %v742, %v717
      %vm747 = vcmp.lt.s32.totalorder %v744, %v719
      %v748 = vsel %vm747, %v744, %v719
      %vm749 = vcmp.lt.s32.totalorder %v746, %v721
      %v750 = vsel %vm749, %v746, %v721
      %vm751 = vcmp.lt.s32.totalorder %v748, %v723
      %v752 = vsel %vm751, %v748, %v723
      %vm753 = vcmp.lt.s32.totalorder %v750, %v725
      %v754 = vsel %vm753, %v750, %v725
      %vm755 = vcmp.lt.s32.totalorder %v752, %v727
      %v756 = vsel %vm755, %v752, %v727
      %vm757 = vcmp.lt.s32.totalorder %v754, %v729
      %v758 = vsel %vm757, %v754, %v729
      %vm759 = vcmp.lt.s32.totalorder %v756, %v731
      %v760 = vsel %vm759, %v756, %v731
      %vm761 = vcmp.lt.s32.totalorder %v758, %v760
      %v762 = vsel %vm761, %v758, %v760
      %v763 = vrot.slane %v762, 4
      %vm764 = vcmp.lt.s32.totalorder %v762, %v763
      %v765 = vsel %vm764, %v762, %v763
      %v766 = vrot.slane %v765, 2
      %vm767 = vcmp.lt.s32.totalorder %v765, %v766
      %v768 = vsel %vm767, %v765, %v766
      %v769 = vrot.slane %v768, 1
      %vm770 = vcmp.lt.s32.totalorder %v768, %v769
      %v771 = vsel %vm770, %v768, %v769
      %vm772 = vcmp.lt.s32.totalorder %v702, %v706
      %v773 = vsel %vm772, %v702, %v706
      %vm774 = vcmp.lt.s32.totalorder %v704, %v708
      %v775 = vsel %vm774, %v704, %v708
      %vm776 = vcmp.lt.s32.totalorder %v773, %v710
      %v777 = vsel %vm776, %v773, %v710
      %vm778 = vcmp.lt.s32.totalorder %v775, %v712
      %v779 = vsel %vm778, %v775, %v712
      %vm780 = vcmp.lt.s32.totalorder %v777, %v714
      %v781 = vsel %vm780, %v777, %v714
      %vm782 = vcmp.lt.s32.totalorder %v779, %v716
      %v783 = vsel %vm782, %v779, %v716
      %vm784 = vcmp.lt.s32.totalorder %v781, %v718
      %v785 = vsel %vm784, %v781, %v718
      %vm786 = vcmp.lt.s32.totalorder %v783, %v720
      %v787 = vsel %vm786, %v783, %v720
      %vm788 = vcmp.lt.s32.totalorder %v785, %v722
      %v789 = vsel %vm788, %v785, %v722
      %vm790 = vcmp.lt.s32.totalorder %v787, %v724
      %v791 = vsel %vm790, %v787, %v724
      %vm792 = vcmp.lt.s32.totalorder %v789, %v726
      %v793 = vsel %vm792, %v789, %v726
      %vm794 = vcmp.lt.s32.totalorder %v791, %v728
      %v795 = vsel %vm794, %v791, %v728
      %vm796 = vcmp.lt.s32.totalorder %v793, %v730
      %v797 = vsel %vm796, %v793, %v730
      %vm798 = vcmp.lt.s32.totalorder %v795, %v732
      %v799 = vsel %vm798, %v795, %v732
      %vm800 = vcmp.lt.s32.totalorder %v797, %v799
      %v801 = vsel %vm800, %v797, %v799
      %v802 = vrot.slane %v801, 4
      %vm803 = vcmp.lt.s32.totalorder %v801, %v802
      %v804 = vsel %vm803, %v801, %v802
      %v805 = vrot.slane %v804, 2
      %vm806 = vcmp.lt.s32.totalorder %v804, %v805
      %v807 = vsel %vm806, %v804, %v805
      %v808 = vrot.slane %v807, 1
      %vm809 = vcmp.lt.s32.totalorder %v807, %v808
      %v810 = vsel %vm809, %v807, %v808
      %vm811 = vcmp.eq.s32.totalorder %v653, %v771
      %vm812 = vcmp.eq.s32.totalorder %v653, %v810
      %vm813 = vcmp.eq.s32.totalorder %v654, %v771
      %vm814 = vcmp.eq.s32.totalorder %v654, %v810
      %vm815 = vcmp.eq.s32.totalorder %v655, %v771
      %vm816 = vcmp.eq.s32.totalorder %v655, %v810
      %vm817 = vcmp.eq.s32.totalorder %v656, %v771
      %vm818 = vcmp.eq.s32.totalorder %v656, %v810
      %vm819 = vcmp.eq.s32.totalorder %v657, %v771
      %vm820 = vcmp.eq.s32.totalorder %v657, %v810
      %vm821 = vcmp.eq.s32.totalorder %v658, %v771
      %vm822 = vcmp.eq.s32.totalorder %v658, %v810
      %vm823 = vcmp.eq.s32.totalorder %v659, %v771
      %vm824 = vcmp.eq.s32.totalorder %v659, %v810
      %vm825 = vcmp.eq.s32.totalorder %v660, %v771
      %vm826 = vcmp.eq.s32.totalorder %v660, %v810
      %vm827 = vcmp.eq.s32.totalorder %v661, %v771
      %vm828 = vcmp.eq.s32.totalorder %v661, %v810
      %vm829 = vcmp.eq.s32.totalorder %v662, %v771
      %vm830 = vcmp.eq.s32.totalorder %v662, %v810
      %vm831 = vcmp.eq.s32.totalorder %v663, %v771
      %vm832 = vcmp.eq.s32.totalorder %v663, %v810
      %vm833 = vcmp.eq.s32.totalorder %v664, %v771
      %vm834 = vcmp.eq.s32.totalorder %v664, %v810
      %vm835 = vcmp.eq.s32.totalorder %v665, %v771
      %vm836 = vcmp.eq.s32.totalorder %v665, %v810
      %vm837 = vcmp.eq.s32.totalorder %v666, %v771
      %vm838 = vcmp.eq.s32.totalorder %v666, %v810
      %vm839 = vcmp.eq.s32.totalorder %v667, %v771
      %vm840 = vcmp.eq.s32.totalorder %v667, %v810
      %vm841 = vcmp.eq.s32.totalorder %v668, %v771
      %vm842 = vcmp.eq.s32.totalorder %v668, %v810
      %v843 = vsel %vm811, 1, 0
      %v844 = vsel %vm812, 1, 0
      %v845 = vsel %vm813, 1, 0
      %v846 = vsel %vm814, 1, 0
      %v847 = vsel %vm815, 1, 0
      %v848 = vsel %vm816, 1, 0
      %v849 = vsel %vm817, 1, 0
      %v850 = vsel %vm818, 1, 0
      %v851 = vsel %vm819, 1, 0
      %v852 = vsel %vm820, 1, 0
      %v853 = vsel %vm821, 1, 0
      %v854 = vsel %vm822, 1, 0
      %v855 = vsel %vm823, 1, 0
      %v856 = vsel %vm824, 1, 0
      %v857 = vsel %vm825, 1, 0
      %v858 = vsel %vm826, 1, 0
      %v859 = vsel %vm827, 1, 0
      %v860 = vsel %vm828, 1, 0
      %v861 = vsel %vm829, 1, 0
      %v862 = vsel %vm830, 1, 0
      %v863 = vsel %vm831, 1, 0
      %v864 = vsel %vm832, 1, 0
      %v865 = vsel %vm833, 1, 0
      %v866 = vsel %vm834, 1, 0
      %v867 = vsel %vm835, 1, 0
      %v868 = vsel %vm836, 1, 0
      %v869 = vsel %vm837, 1, 0
      %v870 = vsel %vm838, 1, 0
      %v871 = vsel %vm839, 1, 0
      %v872 = vsel %vm840, 1, 0
      %v873 = vsel %vm841, 1, 0
      %v874 = vsel %vm842, 1, 0
      %v875 = vcvt.s32.f32 %v843
      %v876 = vcvt.s32.f32 %v844
      %v877 = vcvt.s32.f32 %v845
      %v878 = vcvt.s32.f32 %v846
      %v879 = vcvt.s32.f32 %v847
      %v880 = vcvt.s32.f32 %v848
      %v881 = vcvt.s32.f32 %v849
      %v882 = vcvt.s32.f32 %v850
      %v883 = vcvt.s32.f32 %v851
      %v884 = vcvt.s32.f32 %v852
      %v885 = vcvt.s32.f32 %v853
      %v886 = vcvt.s32.f32 %v854
      %v887 = vcvt.s32.f32 %v855
      %v888 = vcvt.s32.f32 %v856
      %v889 = vcvt.s32.f32 %v857
      %v890 = vcvt.s32.f32 %v858
      %v891 = vcvt.s32.f32 %v859
      %v892 = vcvt.s32.f32 %v860
      %v893 = vcvt.s32.f32 %v861
      %v894 = vcvt.s32.f32 %v862
      %v895 = vcvt.s32.f32 %v863
      %v896 = vcvt.s32.f32 %v864
      %v897 = vcvt.s32.f32 %v865
      %v898 = vcvt.s32.f32 %v866
      %v899 = vcvt.s32.f32 %v867
      %v900 = vcvt.s32.f32 %v868
      %v901 = vcvt.s32.f32 %v869
      %v902 = vcvt.s32.f32 %v870
      %v903 = vcvt.s32.f32 %v871
      %v904 = vcvt.s32.f32 %v872
      %v905 = vcvt.s32.f32 %v873
      %v906 = vcvt.s32.f32 %v874
      %907 = vxpose.xlu0.b32.start [1/16] %v303, 128
      %908 = vxpose.xlu0.b32.cont [2/16] %v304, 128
      %909 = vxpose.xlu0.b32.cont [3/16] %v305, 128
      %910 = vxpose.xlu0.b32.cont [4/16] %v306, 128
      %911 = vxpose.xlu0.b32.cont [5/16] %v307, 128
      %912 = vxpose.xlu0.b32.cont [6/16] %v308, 128
      %913 = vxpose.xlu0.b32.cont [7/16] %v309, 128
      %914 = vxpose.xlu0.b32.cont [8/16] %v310, 128
      %915 = vxpose.xlu0.b32.cont [9/16] %v311, 128
      %916 = vxpose.xlu0.b32.cont [10/16] %v312, 128
      %917 = vxpose.xlu0.b32.cont [11/16] %v313, 128
      %918 = vxpose.xlu0.b32.cont [12/16] %v314, 128
      %919 = vxpose.xlu0.b32.cont [13/16] %v315, 128
      %920 = vxpose.xlu0.b32.cont [14/16] %v316, 128
      %921 = vxpose.xlu0.b32.cont [15/16] %v317, 128
      %922 = vxpose.xlu0.b32.end [16/16] %v318, 128
      %v923 = vpop.trf.xlu0
      %v924 = vpop.trf.xlu0
      %v925 = vpop.trf.xlu0
      %v926 = vpop.trf.xlu0
      %v927 = vpop.trf.xlu0
      %v928 = vpop.trf.xlu0
      %v929 = vpop.trf.xlu0
      %v930 = vpop.trf.xlu0
      %v931 = vpop.trf.xlu0
      %v932 = vpop.trf.xlu0
      %v933 = vpop.trf.xlu0
      %v934 = vpop.trf.xlu0
      %v935 = vpop.trf.xlu0
      %v936 = vpop.trf.xlu0
      %v937 = vpop.trf.xlu0
      %v938 = vpop.trf.xlu0
      %939 = vmatpush.msra.mxu0 %v905
      %940 = vmatpush.msra.mxu0 %v903
      %941 = vmatpush.msra.mxu0 %v901
      %942 = vmatpush.msra.mxu0 %v899
      %943 = vmatpush.msra.mxu0 %v897
      %944 = vmatpush.msra.mxu0 %v895
      %945 = vmatpush.msra.mxu0 %v893
      %946 = vmatpush.msra.mxu0 %v891
      %947 = vmatpush.msra.mxu0 %v889
      %948 = vmatpush.msra.mxu0 %v887
      %949 = vmatpush.msra.mxu0 %v885
      %950 = vmatpush.msra.mxu0 %v883
      %951 = vmatpush.msra.mxu0 %v881
      %952 = vmatpush.msra.mxu0 %v879
      %953 = vmatpush.msra.mxu0 %v877
      %954 = vmatpush.msra.mxu0 %v875
      %955 = vmatmul.f32.gmra.mxu0 %v923
      %v956 = vpop.f32.mrf.mxu0
      %v957 = vadd.f32 0.0, %v956
      %958 = vdwg.mxu0
      %959 = vmatpush.msra.mxu0 %v906
      %960 = vmatpush.msra.mxu0 %v904
      %961 = vmatpush.msra.mxu0 %v902
      %962 = vmatpush.msra.mxu0 %v900
      %963 = vmatpush.msra.mxu0 %v898
      %964 = vmatpush.msra.mxu0 %v896
      %965 = vmatpush.msra.mxu0 %v894
      %966 = vmatpush.msra.mxu0 %v892
      %967 = vmatpush.msra.mxu0 %v890
      %968 = vmatpush.msra.mxu0 %v888
      %969 = vmatpush.msra.mxu0 %v886
      %970 = vmatpush.msra.mxu0 %v884
      %971 = vmatpush.msra.mxu0 %v882
      %972 = vmatpush.msra.mxu0 %v880
      %973 = vmatpush.msra.mxu0 %v878
      %974 = vmatpush.msra.mxu0 %v876
      %975 = vmatmul.f32.gmra.mxu0 %v923
      %v976 = vpop.f32.mrf.mxu0
      %v977 = vadd.f32 0.0, %v976
      %978 = vdwg.mxu0
      %979 = vst [vmem:[%s268] sm:$0xff] %v957
      %980 = vst [vmem:[%s268 + $0x8] sm:$0xff] %v977
      %v981 = vld [vmem:[%s274] sm:$0xff]
      %v982 = vld [vmem:[%s274 + $0x8] sm:$0xff]
      %v983 = vld [vmem:[%s274 + $0x10] sm:$0xff]
      %v984 = vld [vmem:[%s274 + $0x18] sm:$0xff]
      %v985 = vld [vmem:[%s274 + $0x20] sm:$0xff]
      %v986 = vld [vmem:[%s274 + $0x28] sm:$0xff]
      %v987 = vld [vmem:[%s274 + $0x30] sm:$0xff]
      %v988 = vld [vmem:[%s274 + $0x38] sm:$0xff]
      %v989 = vld [vmem:[%s274 + $0x40] sm:$0xff]
      %v990 = vld [vmem:[%s274 + $0x48] sm:$0xff]
      %v991 = vld [vmem:[%s274 + $0x50] sm:$0xff]
      %v992 = vld [vmem:[%s274 + $0x58] sm:$0xff]
      %v993 = vld [vmem:[%s274 + $0x60] sm:$0xff]
      %v994 = vld [vmem:[%s274 + $0x68] sm:$0xff]
      %v995 = vld [vmem:[%s274 + $0x70] sm:$0xff]
      %v996 = vld [vmem:[%s274 + $0x78] sm:$0xff]
      %997 = vmatpush.msra.mxu0 1.0
      %998 = vmatpush.msra.mxu0 1.0
      %999 = vmatpush.msra.mxu0 1.0
      %1000 = vmatpush.msra.mxu0 1.0
      %1001 = vmatpush.msra.mxu0 1.0
      %1002 = vmatpush.msra.mxu0 1.0
      %1003 = vmatpush.msra.mxu0 1.0
      %1004 = vmatpush.msra.mxu0 1.0
      %1005 = vmatpush.msra.mxu0 1.0
      %1006 = vmatpush.msra.mxu0 1.0
      %1007 = vmatpush.msra.mxu0 1.0
      %1008 = vmatpush.msra.mxu0 1.0
      %1009 = vmatpush.msra.mxu0 1.0
      %1010 = vmatpush.msra.mxu0 1.0
      %1011 = vmatpush.msra.mxu0 1.0
      %1012 = vmatpush.msra.mxu0 1.0
      %1013 = vmatmul.f32.gmra.mxu0 %v875
      %v1014 = vpop.f32.mrf.mxu0
      %v1015 = vadd.f32 0.0, %v1014
      %1016 = vmatmul.f32.gmra.mxu0 %v877
      %v1017 = vpop.f32.mrf.mxu0
      %v1018 = vadd.f32 0.0, %v1017
      %1019 = vmatmul.f32.gmra.mxu0 %v879
      %v1020 = vpop.f32.mrf.mxu0
      %v1021 = vadd.f32 0.0, %v1020
      %1022 = vmatmul.f32.gmra.mxu0 %v881
      %v1023 = vpop.f32.mrf.mxu0
      %v1024 = vadd.f32 0.0, %v1023
      %1025 = vmatmul.f32.gmra.mxu0 %v883
      %v1026 = vpop.f32.mrf.mxu0
      %v1027 = vadd.f32 0.0, %v1026
      %1028 = vmatmul.f32.gmra.mxu0 %v885
      %v1029 = vpop.f32.mrf.mxu0
      %v1030 = vadd.f32 0.0, %v1029
      %1031 = vmatmul.f32.gmra.mxu0 %v887
      %v1032 = vpop.f32.mrf.mxu0
      %v1033 = vadd.f32 0.0, %v1032
      %1034 = vmatmul.f32.gmra.mxu0 %v889
      %v1035 = vpop.f32.mrf.mxu0
      %v1036 = vadd.f32 0.0, %v1035
      %1037 = vmatmul.f32.gmra.mxu0 %v891
      %v1038 = vpop.f32.mrf.mxu0
      %v1039 = vadd.f32 0.0, %v1038
      %1040 = vmatmul.f32.gmra.mxu0 %v893
      %v1041 = vpop.f32.mrf.mxu0
      %v1042 = vadd.f32 0.0, %v1041
      %1043 = vmatmul.f32.gmra.mxu0 %v895
      %v1044 = vpop.f32.mrf.mxu0
      %v1045 = vadd.f32 0.0, %v1044
      %1046 = vmatmul.f32.gmra.mxu0 %v897
      %v1047 = vpop.f32.mrf.mxu0
      %v1048 = vadd.f32 0.0, %v1047
      %1049 = vmatmul.f32.gmra.mxu0 %v899
      %v1050 = vpop.f32.mrf.mxu0
      %v1051 = vadd.f32 0.0, %v1050
      %1052 = vmatmul.f32.gmra.mxu0 %v901
      %v1053 = vpop.f32.mrf.mxu0
      %v1054 = vadd.f32 0.0, %v1053
      %1055 = vmatmul.f32.gmra.mxu0 %v903
      %v1056 = vpop.f32.mrf.mxu0
      %v1057 = vadd.f32 0.0, %v1056
      %1058 = vmatmul.f32.gmra.mxu0 %v905
      %v1059 = vpop.f32.mrf.mxu0
      %v1060 = vadd.f32 0.0, %v1059
      %1061 = vdwg.mxu0
      %1062 = vmatpush.msra.mxu0 1.0
      %1063 = vmatpush.msra.mxu0 1.0
      %1064 = vmatpush.msra.mxu0 1.0
      %1065 = vmatpush.msra.mxu0 1.0
      %1066 = vmatpush.msra.mxu0 1.0
      %1067 = vmatpush.msra.mxu0 1.0
      %1068 = vmatpush.msra.mxu0 1.0
      %1069 = vmatpush.msra.mxu0 1.0
      %1070 = vmatpush.msra.mxu0 1.0
      %1071 = vmatpush.msra.mxu0 1.0
      %1072 = vmatpush.msra.mxu0 1.0
      %1073 = vmatpush.msra.mxu0 1.0
      %1074 = vmatpush.msra.mxu0 1.0
      %1075 = vmatpush.msra.mxu0 1.0
      %1076 = vmatpush.msra.mxu0 1.0
      %1077 = vmatpush.msra.mxu0 1.0
      %1078 = vmatmul.f32.gmra.mxu0 %v876
      %v1079 = vpop.f32.mrf.mxu0
      %v1080 = vadd.f32 %v1015, %v1079
      %1081 = vmatmul.f32.gmra.mxu0 %v878
      %v1082 = vpop.f32.mrf.mxu0
      %v1083 = vadd.f32 %v1018, %v1082
      %1084 = vmatmul.f32.gmra.mxu0 %v880
      %v1085 = vpop.f32.mrf.mxu0
      %v1086 = vadd.f32 %v1021, %v1085
      %1087 = vmatmul.f32.gmra.mxu0 %v882
      %v1088 = vpop.f32.mrf.mxu0
      %v1089 = vadd.f32 %v1024, %v1088
      %1090 = vmatmul.f32.gmra.mxu0 %v884
      %v1091 = vpop.f32.mrf.mxu0
      %v1092 = vadd.f32 %v1027, %v1091
      %1093 = vmatmul.f32.gmra.mxu0 %v886
      %v1094 = vpop.f32.mrf.mxu0
      %v1095 = vadd.f32 %v1030, %v1094
      %1096 = vmatmul.f32.gmra.mxu0 %v888
      %v1097 = vpop.f32.mrf.mxu0
      %v1098 = vadd.f32 %v1033, %v1097
      %1099 = vmatmul.f32.gmra.mxu0 %v890
      %v1100 = vpop.f32.mrf.mxu0
      %v1101 = vadd.f32 %v1036, %v1100
      %1102 = vmatmul.f32.gmra.mxu0 %v892
      %v1103 = vpop.f32.mrf.mxu0
      %v1104 = vadd.f32 %v1039, %v1103
      %1105 = vmatmul.f32.gmra.mxu0 %v894
      %v1106 = vpop.f32.mrf.mxu0
      %v1107 = vadd.f32 %v1042, %v1106
      %1108 = vmatmul.f32.gmra.mxu0 %v896
      %v1109 = vpop.f32.mrf.mxu0
      %v1110 = vadd.f32 %v1045, %v1109
      %1111 = vmatmul.f32.gmra.mxu0 %v898
      %v1112 = vpop.f32.mrf.mxu0
      %v1113 = vadd.f32 %v1048, %v1112
      %1114 = vmatmul.f32.gmra.mxu0 %v900
      %v1115 = vpop.f32.mrf.mxu0
      %v1116 = vadd.f32 %v1051, %v1115
      %1117 = vmatmul.f32.gmra.mxu0 %v902
      %v1118 = vpop.f32.mrf.mxu0
      %v1119 = vadd.f32 %v1054, %v1118
      %1120 = vmatmul.f32.gmra.mxu0 %v904
      %v1121 = vpop.f32.mrf.mxu0
      %v1122 = vadd.f32 %v1057, %v1121
      %1123 = vmatmul.f32.gmra.mxu0 %v906
      %v1124 = vpop.f32.mrf.mxu0
      %v1125 = vadd.f32 %v1060, %v1124
      %1126 = vdwg.mxu0
      %v1127 = vadd.f32 %v981, %v1080
      %v1128 = vadd.f32 %v982, %v1083
      %v1129 = vadd.f32 %v983, %v1086
      %v1130 = vadd.f32 %v984, %v1089
      %v1131 = vadd.f32 %v985, %v1092
      %v1132 = vadd.f32 %v986, %v1095
      %v1133 = vadd.f32 %v987, %v1098
      %v1134 = vadd.f32 %v988, %v1101
      %v1135 = vadd.f32 %v989, %v1104
      %v1136 = vadd.f32 %v990, %v1107
      %v1137 = vadd.f32 %v991, %v1110
      %v1138 = vadd.f32 %v992, %v1113
      %v1139 = vadd.f32 %v993, %v1116
      %v1140 = vadd.f32 %v994, %v1119
      %v1141 = vadd.f32 %v995, %v1122
      %v1142 = vadd.f32 %v996, %v1125
      %vm1143 = vcmask 7168
      %1144 = vst.msk [vmem:[%s274] sm:$0xff] %vm1143, %v1127
      %1145 = vst.msk [vmem:[%s274 + $0x8] sm:$0xff] %vm1143, %v1128
      %1146 = vst.msk [vmem:[%s274 + $0x10] sm:$0xff] %vm1143, %v1129
      %1147 = vst.msk [vmem:[%s274 + $0x18] sm:$0xff] %vm1143, %v1130
      %1148 = vst.msk [vmem:[%s274 + $0x20] sm:$0xff] %vm1143, %v1131
      %1149 = vst.msk [vmem:[%s274 + $0x28] sm:$0xff] %vm1143, %v1132
      %1150 = vst.msk [vmem:[%s274 + $0x30] sm:$0xff] %vm1143, %v1133
      %1151 = vst.msk [vmem:[%s274 + $0x38] sm:$0xff] %vm1143, %v1134
      %1152 = vst.msk [vmem:[%s274 + $0x40] sm:$0xff] %vm1143, %v1135
      %1153 = vst.msk [vmem:[%s274 + $0x48] sm:$0xff] %vm1143, %v1136
      %1154 = vst.msk [vmem:[%s274 + $0x50] sm:$0xff] %vm1143, %v1137
      %1155 = vst.msk [vmem:[%s274 + $0x58] sm:$0xff] %vm1143, %v1138
      %1156 = vst.msk [vmem:[%s274 + $0x60] sm:$0xff] %vm1143, %v1139
      %1157 = vst.msk [vmem:[%s274 + $0x68] sm:$0xff] %vm1143, %v1140
      %1158 = vst.msk [vmem:[%s274 + $0x70] sm:$0xff] %vm1143, %v1141
      %1159 = vst.msk [vmem:[%s274 + $0x78] sm:$0xff] %vm1143, %v1142
      %v1160 = vmul.f32 %v301, %v301
      %v1161 = vmul.f32 %v302, %v302
      %v1162 = vrot.slane %v1160, 4
      %v1163 = vadd.f32 %v1160, %v1162
      %v1164 = vrot.slane %v1163, 2
      %v1165 = vadd.f32 %v1163, %v1164
      %v1166 = vrot.slane %v1165, 1
      %v1167 = vadd.f32 %v1165, %v1166
      %v1168 = vrot.slane %v1161, 4
      %v1169 = vadd.f32 %v1161, %v1168
      %v1170 = vrot.slane %v1169, 2
      %v1171 = vadd.f32 %v1169, %v1170
      %v1172 = vrot.slane %v1171, 1
      %v1173 = vadd.f32 %v1171, %v1172
      %v1174 = vld [vmem:[%s277] sm:$0x1]
      %v1175 = vadd.f32 %v1167, %v630
      %v1176 = vadd.f32 %v1173, %v651
      %v1177 = vmax.f32 %v1175, 0.0
      %v1178 = vmax.f32 %v1176, 0.0
      %v1179 = vadd.f32 %v1177, %v1178
      %1180 = vadd.xlane.f32.xlu0 %v1179
      %v1181 = vpop.xlane.xlu0 %1180
      %v1182 = vadd.f32 %v1174, %v1181
      %vm1183 = vcmask 0
      %1184 = vst.msk [vmem:[%s277] sm:$0x1] %vm1183, %v1182
      %s1185 = smul.u32 2, %s21
      %p1186 = scmp.lt.s32.totalorder %s20, 1
      %s1187 = scalar_select %p1186, %s20, 1
      %p1188 = scmp.lt.s32.totalorder %s1185, 3
      %s1189 = scalar_select %p1188, %s1185, 3
      %s1190 = smul.addr %s1187, 4
      %s1191 = sadd.s32 %s1189, %s1190
      %s1192 = smul.addr %s1191, 8
      %s1193 = scalar_lea.vmem %s2, %s1192
      %p1194 = scmp.lt.s32.totalorder %s20, 1
      %s1195 = scalar_select %p1194, %s20, 1
      %s1196 = smul.addr %s1195, 16
      %s1197 = smul.addr %s1196, 8
      %s1198 = scalar_lea.vmem %s3, %s1197
      %p1199 = scmp.lt.s32.totalorder %s20, 1
      %s1200 = scalar_select %p1199, %s20, 1
      %s1201 = scalar_lea.vmem %s4, %s1200
      // Predicated region
      $region33: #{vq_embedding_forward.1} parent=27 // pred_check
        %p1202 = pneg %p102
      $region34: #{vq_embedding_forward.1} parent=27 // pred_check_branch
        %1204 = sbr.rel (%p1202) target = $region36
      $region35: #{vq_embedding_forward.1} parent=27 // pred_region
        %s1205 = smul.u32 2, %s21
      $region36: #{vq_embedding_forward.1} parent=27 // pred_fallthru
        _
      // Predicated region
      $region37: #{vq_embedding_forward.1} parent=27 // pred_check
        %p1206 = pneg %p128
      $region38: #{vq_embedding_forward.1} parent=27 // pred_check_branch
        %1208 = sbr.rel (%p1206) target = $region40
      $region39: #{vq_embedding_forward.1} parent=27 // pred_region
        _
      $region40: #{vq_embedding_forward.1} parent=27 // pred_fallthru
        _
      // Predicated region
      $region41: #{vq_embedding_forward.1} parent=27 // pred_check
        %p1209 = pneg %p154
      $region42: #{vq_embedding_forward.1} parent=27 // pred_check_branch
        %1211 = sbr.rel (%p1209) target = $region44
      $region43: #{vq_embedding_forward.1} parent=27 // pred_region
        _
      $region44: #{vq_embedding_forward.1} parent=27 // pred_fallthru
        _
    $region28: #{vq_embedding_forward.1} parent=5 // pred_fallthru
      _
    %p1212 = scmp.le.s32.totalorder 2, %s11
    // Predicated region
    $region45: #{vq_embedding_forward.1} parent=5 // pred_check
      %p1213 = pneg %p1212
    $region46: #{vq_embedding_forward.1} parent=5 // pred_check_branch
      %1215 = sbr.rel (%p1213) target = $region48
    $region47: #{vq_embedding_forward.1} parent=5 // pred_region
      %s1216 = ssub.s32 %s11, 2
      // Predicated region
      $region49: #{vq_embedding_forward.1} parent=47 // pred_check
        %p1217 = pneg %p108
      $region50: #{vq_embedding_forward.1} parent=47 // pred_check_branch
        %1219 = sbr.rel (%p1217) target = $region52
      $region51: #{vq_embedding_forward.1} parent=47 // pred_region
        %s1220 = smul.u32 2, %s23
        %p1221 = scmp.lt.s32.totalorder %s22, 1
        %s1222 = scalar_select %p1221, %s22, 1
        %p1223 = scmp.lt.s32.totalorder %s1220, 3
        %s1224 = scalar_select %p1223, %s1220, 3
        %s1225 = smul.addr %s1222, 4
        %s1226 = sadd.s32 %s1224, %s1225
        %s1227 = smul.addr %s1226, 8
        %s1228 = scalar_lea.vmem %s2, %s1227
      $region52: #{vq_embedding_forward.1} parent=47 // pred_fallthru
        _
      // Predicated region
      $region53: #{vq_embedding_forward.1} parent=47 // pred_check
        %p1229 = pneg %p134
      $region54: #{vq_embedding_forward.1} parent=47 // pred_check_branch
        %1231 = sbr.rel (%p1229) target = $region56
      $region55: #{vq_embedding_forward.1} parent=47 // pred_region
        %p1232 = scmp.lt.s32.totalorder %s22, 1
        %s1233 = scalar_select %p1232, %s22, 1
        %s1234 = smul.addr %s1233, 16
        %s1235 = smul.addr %s1234, 8
        %s1236 = scalar_lea.vmem %s3, %s1235
      $region56: #{vq_embedding_forward.1} parent=47 // pred_fallthru
        _
      // Predicated region
      $region57: #{vq_embedding_forward.1} parent=47 // pred_check
        %p1237 = pneg %p160
      $region58: #{vq_embedding_forward.1} parent=47 // pred_check_branch
        %1239 = sbr.rel (%p1237) target = $region60
      $region59: #{vq_embedding_forward.1} parent=47 // pred_region
        %p1240 = scmp.lt.s32.totalorder %s22, 1
        %s1241 = scalar_select %p1240, %s22, 1
        %s1242 = scalar_lea.vmem %s4, %s1241
      $region60: #{vq_embedding_forward.1} parent=47 // pred_fallthru
        _
    $region48: #{vq_embedding_forward.1} parent=5 // pred_fallthru
      _
  $region6: #{vq_embedding_forward.1} parent=0 // loop_footer
    %s15 = sadd.s32 1, %s11
  $region7: #{vq_embedding_forward.1} parent=0 // loop_footer_branch
    %10 = sbr.rel target = $region3
  $region8: #{vq_embedding_forward.1} parent=0 // loop_exit
    _

</llo_original>
